<compile_context>
chip_gen: v7x
topology: tpu7x:2x2x1
jax: 0.10.0
libtpu: 0.0.40
codegen_flags: <defaults>
</compile_context>

<pallas_src>
import functools

import jax
import jax.numpy as jnp
from jax.experimental import pallas as pl
from jax.experimental.pallas import tpu as pltpu

KH = KW = 3            # module defaults: kernel_size=3, stride=1, padding=1

# Pointwise 1x1: VPU broadcast-FMA path below this Cin, MXU jnp.dot above.
# (v5e's 4x128x128 MXU pays off a bit earlier; v6e/v7x's 2x256x256 keep the
#  VPU loop competitive to larger channel counts.)
_PW_MXU_CUTOVER = 32


def _dwsep_kernel(x_ref, valid_ref, wdw_ref, wpw_ref, bpw_ref, o_ref, *, H, W):
    # x_ref    : (NB*Cin, H*W)    NB images, channel-major, spatial on lanes
    # valid_ref: (KH*KW, H*W)     precomputed zero-padding masks (1.0 / 0.0)
    # wdw_ref  : (NB*Cin, KH*KW)  depthwise taps, tiled over NB
    # wpw_ref  : (Cout, Cin)      pointwise weight
    # bpw_ref  : (Cout, 1)        pointwise bias (depthwise bias pre-folded)
    # o_ref    : (NB*Cout, H*W)
    Cout, Cin = wpw_ref.shape
    NBCin, HW = x_ref.shape
    NB = NBCin // Cin

    x = x_ref[...].astype(jnp.float32)        # (NB*Cin, HW)
    wdw = wdw_ref[...].astype(jnp.float32)    # (NB*Cin, 9)
    valid = valid_ref[...]                    # (9, HW), f32 {0,1}

    # ---- depthwise 3x3, stride 1, pad 1: shifted lane reads (XLU roll) ----
    # TODO(synk): on v6e/v7x the tap FMAs could run in bf16 ([16,128] packing)
    # for ~2x VALU throughput if the accuracy budget allows; skip on v5e
    # (no bf16 VPU there).
    acc = jnp.zeros((NBCin, HW), dtype=jnp.float32)
    for dy in range(KH):
        for dx in range(KW):
            k = dy * KW + dx
            off = (dy - 1) * W + (dx - 1)     # flattened source offset
            # shifted[p] == x[p + off]; wrapped / out-of-image entries are
            # exactly the ones zeroed by the precomputed mask below.
            if off == 0:
                shifted = x
            else:
                shifted = pltpu.roll(x, shift=(-off) % HW, axis=1)
            term = shifted * wdw[:, k:k + 1]            # per-channel tap
            if dy != 1 or dx != 1:                      # boundary tap
                term = term * valid[k:k + 1, :]
            acc = acc + term

    # ---- pointwise 1x1 per image ------------------------------------------
    wpw = wpw_ref[...].astype(jnp.float32)    # (Cout, Cin)
    bpw = bpw_ref[...].astype(jnp.float32)    # (Cout, 1)
    for nb in range(NB):
        base = nb * Cin
        if Cin <= _PW_MXU_CUTOVER:
            # Tiny contraction dim: Cin broadcast-FMAs on the VPU beat the
            # MXU push/drain latency at K=Cin, N=Cout this small.
            out = wpw[:, 0:1] * acc[base:base + 1, :]
            for c in range(1, Cin):
                out = out + wpw[:, c:c + 1] * acc[base + c:base + c + 1, :]
        else:
            out = jnp.dot(wpw, acc[base:base + Cin, :],
                          preferred_element_type=jnp.float32)
        o_ref[nb * Cout:(nb + 1) * Cout, :] = (out + bpw).astype(o_ref.dtype)


def _pick_batch_block(N, Cin):
    """Images per grid step.

    Prefer the smallest divisor of N that fills the 8 f32 sublanes
    (NB*Cin >= 8): full vregs for the VALU-bound depthwise loop while keeping
    the grid as long as possible (>=2 parallel steps feeds both v7x
    TensorCores when N allows).  If no divisor can fill the sublanes, take
    the whole batch in one step (grid-step overhead dominates at that size).
    """
    divisors = [d for d in range(1, N + 1) if N % d == 0]
    filling = [d for d in divisors if d * Cin >= 8]
    return filling[0] if filling else N


def depthwise_separable_conv(x_nchw, w_dw, b_dw, w_pw, b_pw):
    """Forward pass matching the PyTorch module (kernel 3x3, stride 1, pad 1).

    x_nchw : (N, Cin, H, W)
    w_dw   : (Cin, 1, KH, KW)   depthwise conv weight (groups=Cin)
    b_dw   : (Cin,)
    w_pw   : (Cout, Cin, 1, 1)  pointwise conv weight
    b_pw   : (Cout,)
    returns (N, Cout, H, W)
    """
    N, Cin, H, W = x_nchw.shape
    Cout = w_pw.shape[0]
    HW = H * W
    NB = _pick_batch_block(N, Cin)
    NG = N // NB

    # Free reshapes only -- NCHW is already channel-major / spatially contiguous.
    # TODO(synk): if HW (or a future row-strip width) is not a multiple of 128,
    # pad W here so output stores stay lane-dense (unmasked vst).
    x_blk = x_nchw.reshape(NG, NB * Cin, HW)

    wdw = jnp.tile(w_dw.reshape(Cin, KH * KW), (NB, 1)).astype(jnp.float32)
    wpw = w_pw.reshape(Cout, Cin).astype(jnp.float32)
    # Fold the depthwise bias into the pointwise bias (pointwise is linear):
    #   pw(dw_out + b_dw) = wpw @ dw_out + (wpw @ b_dw + b_pw)
    bpw = (b_pw.astype(jnp.float32) + wpw @ b_dw.astype(jnp.float32)
           ).reshape(Cout, 1)

    # Precomputed zero-padding masks: one lane-dense row per tap, resident in
    # VMEM for the whole grid (constant index_map -> DMA'd once).
    hh = (jnp.arange(HW, dtype=jnp.int32) // W)[None, :]
    ww = (jnp.arange(HW, dtype=jnp.int32) % W)[None, :]
    rows = []
    for dy in range(KH):
        for dx in range(KW):
            sy, sx = dy - 1, dx - 1
            rows.append((hh + sy >= 0) & (hh + sy < H) &
                        (ww + sx >= 0) & (ww + sx < W))
    valid = jnp.concatenate(rows, axis=0).astype(jnp.float32)     # (9, HW)

    kernel = functools.partial(_dwsep_kernel, H=H, W=W)

    flops = N * HW * (2 * KH * KW * Cin + 2 * Cin * Cout)
    bytes_accessed = 4 * (N * Cin * HW + N * Cout * HW + KH * KW * HW
                          + NB * Cin * KH * KW + Cout * Cin + Cout)

    # TODO(synk): for production image sizes, tile H into row strips
    # (grid (NG, H//TH)) with a 1-row halo, sizing the strip against
    # pltpu.get_tpu_info() VMEM (64 MiB physical on v7x vs 128 MiB on
    # v5e/v6e) and setting vmem_limit_bytes explicitly.
    out_blk = pl.pallas_call(
        kernel,
        out_shape=jax.ShapeDtypeStruct((NG, NB * Cout, HW), x_nchw.dtype),
        grid_spec=pltpu.PrefetchScalarGridSpec(
            num_scalar_prefetch=0,
            grid=(NG,),
            in_specs=[
                pl.BlockSpec((None, NB * Cin, HW), lambda g: (g, 0, 0)),
                pl.BlockSpec((KH * KW, HW), lambda g: (0, 0)),
                pl.BlockSpec((NB * Cin, KH * KW), lambda g: (0, 0)),
                pl.BlockSpec((Cout, Cin), lambda g: (0, 0)),
                pl.BlockSpec((Cout, 1), lambda g: (0, 0)),
            ],
            out_specs=pl.BlockSpec((None, NB * Cout, HW), lambda g: (g, 0, 0)),
        ),
        compiler_params=pltpu.CompilerParams(
            dimension_semantics=("parallel",)),
        cost_estimate=pl.CostEstimate(
            flops=flops, transcendentals=0, bytes_accessed=bytes_accessed),
    )(x_blk, valid, wdw, wpw, bpw)

    return out_blk.reshape(N, Cout, H, W)


def _reference(x_nchw, w_dw, b_dw, w_pw, b_pw):
    """Pure-JAX reference via lax.conv_general_dilated (PyTorch semantics)."""
    Cin = x_nchw.shape[1]
    dw = jax.lax.conv_general_dilated(
        x_nchw, w_dw, window_strides=(1, 1), padding=((1, 1), (1, 1)),
        dimension_numbers=("NCHW", "OIHW", "NCHW"),
        feature_group_count=Cin)
    dw = dw + b_dw[None, :, None, None]
    pw = jax.lax.conv_general_dilated(
        dw, w_pw, window_strides=(1, 1), padding=((0, 0), (0, 0)),
        dimension_numbers=("NCHW", "OIHW", "NCHW"))
    return pw + b_pw[None, :, None, None]


if __name__ == "__main__":
    # Small shapes consistent with the module: N=2, in_planes=4, out_planes=8, 16x16.
    N, Cin, Cout, H, W = 2, 4, 8, 16, 16

    key = jax.random.PRNGKey(0)
    kx, k1, k2, k3, k4 = jax.random.split(key, 5)

    x = jax.random.normal(kx, (N, Cin, H, W), dtype=jnp.float32)
    # Deterministic synthetic parameters (shapes from nn.Conv2d in __init__).
    w_dw = jax.random.normal(k1, (Cin, 1, KH, KW), dtype=jnp.float32) * 0.1
    b_dw = jax.random.normal(k2, (Cin,), dtype=jnp.float32) * 0.1
    w_pw = jax.random.normal(k3, (Cout, Cin, 1, 1), dtype=jnp.float32) * 0.1
    b_pw = jax.random.normal(k4, (Cout,), dtype=jnp.float32) * 0.1

    out = depthwise_separable_conv(x, w_dw, b_dw, w_pw, b_pw)
    out = jax.block_until_ready(out)

    ref = _reference(x, w_dw, b_dw, w_pw, b_pw)
    assert out.shape == (N, Cout, H, W), out.shape
    assert jnp.allclose(out, ref, atol=1e-4, rtol=1e-4), float(
        jnp.max(jnp.abs(out - ref)))

    print("KERNEL_OK")
</pallas_src>

<mosaic_0001>
module attributes {stable_mosaic.version = 11 : i64} {
  func.func @_dwsep_kernel(%arg0: i32, %arg1: memref<1x8x256xf32, #tpu.memory_space<vmem>>, %arg2: memref<9x256xf32, #tpu.memory_space<vmem>>, %arg3: memref<8x9xf32, #tpu.memory_space<vmem>>, %arg4: memref<8x4xf32, #tpu.memory_space<vmem>>, %arg5: memref<8x1xf32, #tpu.memory_space<vmem>>, %arg6: memref<1x16x256xf32, #tpu.memory_space<vmem>>) attributes {dimension_semantics = [#tpu.dimension_semantics<parallel>], iteration_bounds = array<i64: 1>, scalar_prefetch = 0 : i64, scratch_operands = 0 : i64, tpu.core_type = #tpu.core_type<tc>, window_params = [{transform_indices = @transform_0, window_bounds = array<i64: 1, 8, 256>}, {pipeline_mode = #tpu.pipeline_mode<synchronous>, transform_indices = @transform_1, window_bounds = array<i64: 9, 256>}, {pipeline_mode = #tpu.pipeline_mode<synchronous>, transform_indices = @transform_2, window_bounds = array<i64: 8, 9>}, {pipeline_mode = #tpu.pipeline_mode<synchronous>, transform_indices = @transform_3, window_bounds = array<i64: 8, 4>}, {pipeline_mode = #tpu.pipeline_mode<synchronous>, transform_indices = @transform_4, window_bounds = array<i64: 8, 1>}, {transform_indices = @transform_5, window_bounds = array<i64: 1, 16, 256>}]} {
    %c0 = arith.constant 0 : index
    %c0_0 = arith.constant 0 : index
    %c0_1 = arith.constant 0 : index
    %0 = vector.load %arg1[%c0, %c0_0, %c0_1] : memref<1x8x256xf32, #tpu.memory_space<vmem>>, vector<1x8x256xf32>
    %1 = vector.shape_cast %0 : vector<1x8x256xf32> to vector<8x256xf32>
    %c0_2 = arith.constant 0 : index
    %c0_3 = arith.constant 0 : index
    %2 = vector.load %arg3[%c0_2, %c0_3] : memref<8x9xf32, #tpu.memory_space<vmem>>, vector<8x9xf32>
    %c0_4 = arith.constant 0 : index
    %c0_5 = arith.constant 0 : index
    %3 = vector.load %arg2[%c0_4, %c0_5] : memref<9x256xf32, #tpu.memory_space<vmem>>, vector<9x256xf32>
    %cst = arith.constant 0.000000e+00 : f32
    %4 = vector.broadcast %cst : f32 to vector<8x256xf32>
    %c17_i32 = arith.constant 17 : i32
    %5 = tpu.dynamic_rotate %1 by %c17_i32 dim 1 : vector<8x256xf32>, i32 -> vector<8x256xf32>
    %6 = vector.extract_strided_slice %2 {offsets = [0, 0], sizes = [8, 1], strides = [1, 1]} : vector<8x9xf32> to vector<8x1xf32>
    %7 = vector.broadcast %6 : vector<8x1xf32> to vector<8x256xf32>
    %8 = arith.mulf %5, %7 : vector<8x256xf32>
    %9 = vector.extract_strided_slice %3 {offsets = [0, 0], sizes = [1, 256], strides = [1, 1]} : vector<9x256xf32> to vector<1x256xf32>
    %10 = vector.broadcast %9 : vector<1x256xf32> to vector<8x256xf32>
    %11 = arith.mulf %8, %10 : vector<8x256xf32>
    %12 = arith.addf %4, %11 : vector<8x256xf32>
    %c16_i32 = arith.constant 16 : i32
    %13 = tpu.dynamic_rotate %1 by %c16_i32 dim 1 : vector<8x256xf32>, i32 -> vector<8x256xf32>
    %14 = vector.extract_strided_slice %2 {offsets = [0, 1], sizes = [8, 1], strides = [1, 1]} : vector<8x9xf32> to vector<8x1xf32>
    %15 = vector.broadcast %14 : vector<8x1xf32> to vector<8x256xf32>
    %16 = arith.mulf %13, %15 : vector<8x256xf32>
    %17 = vector.extract_strided_slice %3 {offsets = [1, 0], sizes = [1, 256], strides = [1, 1]} : vector<9x256xf32> to vector<1x256xf32>
    %18 = vector.broadcast %17 : vector<1x256xf32> to vector<8x256xf32>
    %19 = arith.mulf %16, %18 : vector<8x256xf32>
    %20 = arith.addf %12, %19 : vector<8x256xf32>
    %c15_i32 = arith.constant 15 : i32
    %21 = tpu.dynamic_rotate %1 by %c15_i32 dim 1 : vector<8x256xf32>, i32 -> vector<8x256xf32>
    %22 = vector.extract_strided_slice %2 {offsets = [0, 2], sizes = [8, 1], strides = [1, 1]} : vector<8x9xf32> to vector<8x1xf32>
    %23 = vector.broadcast %22 : vector<8x1xf32> to vector<8x256xf32>
    %24 = arith.mulf %21, %23 : vector<8x256xf32>
    %25 = vector.extract_strided_slice %3 {offsets = [2, 0], sizes = [1, 256], strides = [1, 1]} : vector<9x256xf32> to vector<1x256xf32>
    %26 = vector.broadcast %25 : vector<1x256xf32> to vector<8x256xf32>
    %27 = arith.mulf %24, %26 : vector<8x256xf32>
    %28 = arith.addf %20, %27 : vector<8x256xf32>
    %c1_i32 = arith.constant 1 : i32
    %29 = tpu.dynamic_rotate %1 by %c1_i32 dim 1 : vector<8x256xf32>, i32 -> vector<8x256xf32>
    %30 = vector.extract_strided_slice %2 {offsets = [0, 3], sizes = [8, 1], strides = [1, 1]} : vector<8x9xf32> to vector<8x1xf32>
    %31 = vector.broadcast %30 : vector<8x1xf32> to vector<8x256xf32>
    %32 = arith.mulf %29, %31 : vector<8x256xf32>
    %33 = vector.extract_strided_slice %3 {offsets = [3, 0], sizes = [1, 256], strides = [1, 1]} : vector<9x256xf32> to vector<1x256xf32>
    %34 = vector.broadcast %33 : vector<1x256xf32> to vector<8x256xf32>
    %35 = arith.mulf %32, %34 : vector<8x256xf32>
    %36 = arith.addf %28, %35 : vector<8x256xf32>
    %37 = vector.extract_strided_slice %2 {offsets = [0, 4], sizes = [8, 1], strides = [1, 1]} : vector<8x9xf32> to vector<8x1xf32>
    %38 = vector.broadcast %37 : vector<8x1xf32> to vector<8x256xf32>
    %39 = arith.mulf %1, %38 : vector<8x256xf32>
    %40 = arith.addf %36, %39 : vector<8x256xf32>
    %c255_i32 = arith.constant 255 : i32
    %41 = tpu.dynamic_rotate %1 by %c255_i32 dim 1 : vector<8x256xf32>, i32 -> vector<8x256xf32>
    %42 = vector.extract_strided_slice %2 {offsets = [0, 5], sizes = [8, 1], strides = [1, 1]} : vector<8x9xf32> to vector<8x1xf32>
    %43 = vector.broadcast %42 : vector<8x1xf32> to vector<8x256xf32>
    %44 = arith.mulf %41, %43 : vector<8x256xf32>
    %45 = vector.extract_strided_slice %3 {offsets = [5, 0], sizes = [1, 256], strides = [1, 1]} : vector<9x256xf32> to vector<1x256xf32>
    %46 = vector.broadcast %45 : vector<1x256xf32> to vector<8x256xf32>
    %47 = arith.mulf %44, %46 : vector<8x256xf32>
    %48 = arith.addf %40, %47 : vector<8x256xf32>
    %c241_i32 = arith.constant 241 : i32
    %49 = tpu.dynamic_rotate %1 by %c241_i32 dim 1 : vector<8x256xf32>, i32 -> vector<8x256xf32>
    %50 = vector.extract_strided_slice %2 {offsets = [0, 6], sizes = [8, 1], strides = [1, 1]} : vector<8x9xf32> to vector<8x1xf32>
    %51 = vector.broadcast %50 : vector<8x1xf32> to vector<8x256xf32>
    %52 = arith.mulf %49, %51 : vector<8x256xf32>
    %53 = vector.extract_strided_slice %3 {offsets = [6, 0], sizes = [1, 256], strides = [1, 1]} : vector<9x256xf32> to vector<1x256xf32>
    %54 = vector.broadcast %53 : vector<1x256xf32> to vector<8x256xf32>
    %55 = arith.mulf %52, %54 : vector<8x256xf32>
    %56 = arith.addf %48, %55 : vector<8x256xf32>
    %c240_i32 = arith.constant 240 : i32
    %57 = tpu.dynamic_rotate %1 by %c240_i32 dim 1 : vector<8x256xf32>, i32 -> vector<8x256xf32>
    %58 = vector.extract_strided_slice %2 {offsets = [0, 7], sizes = [8, 1], strides = [1, 1]} : vector<8x9xf32> to vector<8x1xf32>
    %59 = vector.broadcast %58 : vector<8x1xf32> to vector<8x256xf32>
    %60 = arith.mulf %57, %59 : vector<8x256xf32>
    %61 = vector.extract_strided_slice %3 {offsets = [7, 0], sizes = [1, 256], strides = [1, 1]} : vector<9x256xf32> to vector<1x256xf32>
    %62 = vector.broadcast %61 : vector<1x256xf32> to vector<8x256xf32>
    %63 = arith.mulf %60, %62 : vector<8x256xf32>
    %64 = arith.addf %56, %63 : vector<8x256xf32>
    %c239_i32 = arith.constant 239 : i32
    %65 = tpu.dynamic_rotate %1 by %c239_i32 dim 1 : vector<8x256xf32>, i32 -> vector<8x256xf32>
    %66 = vector.extract_strided_slice %2 {offsets = [0, 8], sizes = [8, 1], strides = [1, 1]} : vector<8x9xf32> to vector<8x1xf32>
    %67 = vector.broadcast %66 : vector<8x1xf32> to vector<8x256xf32>
    %68 = arith.mulf %65, %67 : vector<8x256xf32>
    %69 = vector.extract_strided_slice %3 {offsets = [8, 0], sizes = [1, 256], strides = [1, 1]} : vector<9x256xf32> to vector<1x256xf32>
    %70 = vector.broadcast %69 : vector<1x256xf32> to vector<8x256xf32>
    %71 = arith.mulf %68, %70 : vector<8x256xf32>
    %72 = arith.addf %64, %71 : vector<8x256xf32>
    %c0_6 = arith.constant 0 : index
    %c0_7 = arith.constant 0 : index
    %73 = vector.load %arg4[%c0_6, %c0_7] : memref<8x4xf32, #tpu.memory_space<vmem>>, vector<8x4xf32>
    %c0_8 = arith.constant 0 : index
    %c0_9 = arith.constant 0 : index
    %74 = vector.load %arg5[%c0_8, %c0_9] : memref<8x1xf32, #tpu.memory_space<vmem>>, vector<8x1xf32>
    %75 = vector.extract_strided_slice %73 {offsets = [0, 0], sizes = [8, 1], strides = [1, 1]} : vector<8x4xf32> to vector<8x1xf32>
    %76 = vector.extract_strided_slice %72 {offsets = [0, 0], sizes = [1, 256], strides = [1, 1]} : vector<8x256xf32> to vector<1x256xf32>
    %77 = vector.broadcast %75 : vector<8x1xf32> to vector<8x256xf32>
    %78 = vector.broadcast %76 : vector<1x256xf32> to vector<8x256xf32>
    %79 = arith.mulf %77, %78 : vector<8x256xf32>
    %80 = vector.extract_strided_slice %73 {offsets = [0, 1], sizes = [8, 1], strides = [1, 1]} : vector<8x4xf32> to vector<8x1xf32>
    %81 = vector.extract_strided_slice %72 {offsets = [1, 0], sizes = [1, 256], strides = [1, 1]} : vector<8x256xf32> to vector<1x256xf32>
    %82 = vector.broadcast %80 : vector<8x1xf32> to vector<8x256xf32>
    %83 = vector.broadcast %81 : vector<1x256xf32> to vector<8x256xf32>
    %84 = arith.mulf %82, %83 : vector<8x256xf32>
    %85 = arith.addf %79, %84 : vector<8x256xf32>
    %86 = vector.extract_strided_slice %73 {offsets = [0, 2], sizes = [8, 1], strides = [1, 1]} : vector<8x4xf32> to vector<8x1xf32>
    %87 = vector.extract_strided_slice %72 {offsets = [2, 0], sizes = [1, 256], strides = [1, 1]} : vector<8x256xf32> to vector<1x256xf32>
    %88 = vector.broadcast %86 : vector<8x1xf32> to vector<8x256xf32>
    %89 = vector.broadcast %87 : vector<1x256xf32> to vector<8x256xf32>
    %90 = arith.mulf %88, %89 : vector<8x256xf32>
    %91 = arith.addf %85, %90 : vector<8x256xf32>
    %92 = vector.extract_strided_slice %73 {offsets = [0, 3], sizes = [8, 1], strides = [1, 1]} : vector<8x4xf32> to vector<8x1xf32>
    %93 = vector.extract_strided_slice %72 {offsets = [3, 0], sizes = [1, 256], strides = [1, 1]} : vector<8x256xf32> to vector<1x256xf32>
    %94 = vector.broadcast %92 : vector<8x1xf32> to vector<8x256xf32>
    %95 = vector.broadcast %93 : vector<1x256xf32> to vector<8x256xf32>
    %96 = arith.mulf %94, %95 : vector<8x256xf32>
    %97 = arith.addf %91, %96 : vector<8x256xf32>
    %98 = vector.broadcast %74 : vector<8x1xf32> to vector<8x256xf32>
    %99 = arith.addf %97, %98 : vector<8x256xf32>
    %c0_10 = arith.constant 0 : index
    %c0_11 = arith.constant 0 : index
    %c0_12 = arith.constant 0 : index
    %100 = vector.load %arg6[%c0_10, %c0_11, %c0_12] : memref<1x16x256xf32, #tpu.memory_space<vmem>>, vector<1x8x256xf32>
    %101 = vector.shape_cast %100 : vector<1x8x256xf32> to vector<8x256xf32>
    %102 = vector.shape_cast %99 : vector<8x256xf32> to vector<1x8x256xf32>
    tpu.vector_store %arg6[%c0_10, %c0_11, %c0_12], %102 {strides = array<i32>} : memref<1x16x256xf32, #tpu.memory_space<vmem>>, vector<1x8x256xf32>,
    %103 = vector.extract_strided_slice %73 {offsets = [0, 0], sizes = [8, 1], strides = [1, 1]} : vector<8x4xf32> to vector<8x1xf32>
    %104 = vector.extract_strided_slice %72 {offsets = [4, 0], sizes = [1, 256], strides = [1, 1]} : vector<8x256xf32> to vector<1x256xf32>
    %105 = vector.broadcast %103 : vector<8x1xf32> to vector<8x256xf32>
    %106 = vector.broadcast %104 : vector<1x256xf32> to vector<8x256xf32>
    %107 = arith.mulf %105, %106 : vector<8x256xf32>
    %108 = vector.extract_strided_slice %73 {offsets = [0, 1], sizes = [8, 1], strides = [1, 1]} : vector<8x4xf32> to vector<8x1xf32>
    %109 = vector.extract_strided_slice %72 {offsets = [5, 0], sizes = [1, 256], strides = [1, 1]} : vector<8x256xf32> to vector<1x256xf32>
    %110 = vector.broadcast %108 : vector<8x1xf32> to vector<8x256xf32>
    %111 = vector.broadcast %109 : vector<1x256xf32> to vector<8x256xf32>
    %112 = arith.mulf %110, %111 : vector<8x256xf32>
    %113 = arith.addf %107, %112 : vector<8x256xf32>
    %114 = vector.extract_strided_slice %73 {offsets = [0, 2], sizes = [8, 1], strides = [1, 1]} : vector<8x4xf32> to vector<8x1xf32>
    %115 = vector.extract_strided_slice %72 {offsets = [6, 0], sizes = [1, 256], strides = [1, 1]} : vector<8x256xf32> to vector<1x256xf32>
    %116 = vector.broadcast %114 : vector<8x1xf32> to vector<8x256xf32>
    %117 = vector.broadcast %115 : vector<1x256xf32> to vector<8x256xf32>
    %118 = arith.mulf %116, %117 : vector<8x256xf32>
    %119 = arith.addf %113, %118 : vector<8x256xf32>
    %120 = vector.extract_strided_slice %73 {offsets = [0, 3], sizes = [8, 1], strides = [1, 1]} : vector<8x4xf32> to vector<8x1xf32>
    %121 = vector.extract_strided_slice %72 {offsets = [7, 0], sizes = [1, 256], strides = [1, 1]} : vector<8x256xf32> to vector<1x256xf32>
    %122 = vector.broadcast %120 : vector<8x1xf32> to vector<8x256xf32>
    %123 = vector.broadcast %121 : vector<1x256xf32> to vector<8x256xf32>
    %124 = arith.mulf %122, %123 : vector<8x256xf32>
    %125 = arith.addf %119, %124 : vector<8x256xf32>
    %126 = vector.broadcast %74 : vector<8x1xf32> to vector<8x256xf32>
    %127 = arith.addf %125, %126 : vector<8x256xf32>
    %c0_13 = arith.constant 0 : index
    %c8 = arith.constant 8 : index
    %c0_14 = arith.constant 0 : index
    %128 = vector.load %arg6[%c0_13, %c8, %c0_14] : memref<1x16x256xf32, #tpu.memory_space<vmem>>, vector<1x8x256xf32>
    %129 = vector.shape_cast %128 : vector<1x8x256xf32> to vector<8x256xf32>
    %130 = vector.shape_cast %127 : vector<8x256xf32> to vector<1x8x256xf32>
    tpu.vector_store %arg6[%c0_13, %c8, %c0_14], %130 {strides = array<i32>} : memref<1x16x256xf32, #tpu.memory_space<vmem>>, vector<1x8x256xf32>,
    return
  }
  func.func @transform_0(%arg0: i32) -> (i32, i32, i32) {
    %c0_i32 = arith.constant 0 : i32
    %c0_i32_0 = arith.constant 0 : i32
    %c0_i32_1 = arith.constant 0 : i32
    return %arg0, %c0_i32, %c0_i32_0 : i32, i32, i32
  }
  func.func @transform_1(%arg0: i32) -> (i32, i32) {
    %c0_i32 = arith.constant 0 : i32
    %c0_i32_0 = arith.constant 0 : i32
    %c0_i32_1 = arith.constant 0 : i32
    return %c0_i32, %c0_i32_0 : i32, i32
  }
  func.func @transform_2(%arg0: i32) -> (i32, i32) {
    %c0_i32 = arith.constant 0 : i32
    %c0_i32_0 = arith.constant 0 : i32
    %c0_i32_1 = arith.constant 0 : i32
    return %c0_i32, %c0_i32_0 : i32, i32
  }
  func.func @transform_3(%arg0: i32) -> (i32, i32) {
    %c0_i32 = arith.constant 0 : i32
    %c0_i32_0 = arith.constant 0 : i32
    %c0_i32_1 = arith.constant 0 : i32
    return %c0_i32, %c0_i32_0 : i32, i32
  }
  func.func @transform_4(%arg0: i32) -> (i32, i32) {
    %c0_i32 = arith.constant 0 : i32
    %c0_i32_0 = arith.constant 0 : i32
    %c0_i32_1 = arith.constant 0 : i32
    return %c0_i32, %c0_i32_0 : i32, i32
  }
  func.func @transform_5(%arg0: i32) -> (i32, i32, i32) {
    %c0_i32 = arith.constant 0 : i32
    %c0_i32_0 = arith.constant 0 : i32
    %c0_i32_1 = arith.constant 0 : i32
    return %arg0, %c0_i32, %c0_i32_0 : i32, i32, i32
  }
}

</mosaic_0001>

<llo_original>
// kernel: tpu_custom_call.1
$region0: #{tpu_custom_call.1}
  #allocation0 [shape = 'u32[]', space=smem, size = 0x4, offset = 0x4, fixed_abs, tag = 'smem constant byte address 0x4 - core index']
  #allocation1 [shape = 'u32[144,128]{1,0:T(1,128)}', space=vmem, size = 0x12000, scoped, tag = 'internal scratch']
  %s0 = inlined_call_operand.vmem [shape: f32[1,8,256], index: 0, kind: input, shape index: {}]
  %s1 = inlined_call_operand.hbm [shape: f32[9,256], index: 1, kind: input, shape index: {}]
  %s2 = inlined_call_operand.vmem [shape: f32[8,9], index: 2, kind: input, shape index: {}]
  %s3 = inlined_call_operand.vmem [shape: f32[8,4], index: 3, kind: input, shape index: {}]
  %s4 = inlined_call_operand.vmem [shape: f32[8,1], index: 4, kind: input, shape index: {}]
  %s5 = inlined_call_operand.hbm [shape: f32[1,16,256], index: 5, kind: output, shape index: {}]
  %s6 = sld [smem:[#allocation0]]
  $region34: #{tpu_custom_call.1} parent=0
    _
  %s8 = ssub.s32 1, %s6
  %s9 = scalar_select 0, %s8, %s6
  $region1: #{tpu_custom_call.1} parent=0
    #allocation2 [shape = 'u8[16384]{0}', space=vmem, size = 0x4000, scoped, tag = 'input window, operand 1, single buffered']
    #allocation3 [shape = 's32[1]{0}', space=sflag, size = 0x4, scoped, tag = 'scoped memory for tpu_custom_call.1']
    #allocation4 [shape = 's32[1]{0}', space=sflag, size = 0x4, scoped, tag = 'scoped memory for tpu_custom_call.1']
    #allocation5 [shape = 'u8[16384]{0}', space=vmem, size = 0x4000, scoped, tag = 'output window, operand 0, single buffered']
    %10 = vsyncpa [#allocation3], 0
    %11 = vsyncpa [#allocation4], 0
    // Predicated region
    $region2: #{tpu_custom_call.1} parent=1 // pred_check
      _
    $region3: #{tpu_custom_call.1} parent=1 // pred_check_branch
      %13 = sbr.rel (0) target = $region5
    $region4: #{tpu_custom_call.1} parent=1 // pred_region
      _
    $region5: #{tpu_custom_call.1} parent=1 // pred_fallthru
      _
    // Predicated region
    $region6: #{tpu_custom_call.1} parent=1 // pred_check
      _
    $region7: #{tpu_custom_call.1} parent=1 // pred_check_branch
      %15 = sbr.rel (0) target = $region9
    $region8: #{tpu_custom_call.1} parent=1 // pred_region
      %s17 = ssub.s32 512, 512
      %18 = vsyncadd [#allocation3], %s17
      %s19 = sshll.u32 [#allocation2], 4
      %s20 = int_to_ptr.vmem [resolvable:$true] %s19
      %25 = dma.hbm_to_vmem [thread:$0]  %s1, 512, %s20, [#allocation3], 256, 256, 16
    $region9: #{tpu_custom_call.1} parent=1 // pred_fallthru
      _
    // Predicated region
    $region10: #{tpu_custom_call.1} parent=1 // pred_check
      _
    $region11: #{tpu_custom_call.1} parent=1 // pred_check_branch
      %27 = sbr.rel (0) target = $region13
    $region12: #{tpu_custom_call.1} parent=1 // pred_region
      _
    $region13: #{tpu_custom_call.1} parent=1 // pred_fallthru
      _
    // Predicated region
    $region14: #{tpu_custom_call.1} parent=1 // pred_check
      _
    $region15: #{tpu_custom_call.1} parent=1 // pred_check_branch
      %29 = sbr.rel (0) target = $region17
    $region16: #{tpu_custom_call.1} parent=1 // pred_region
      _
    $region17: #{tpu_custom_call.1} parent=1 // pred_fallthru
      _
    // Predicated region
    $region18: #{tpu_custom_call.1} parent=1 // pred_check
      _
    $region19: #{tpu_custom_call.1} parent=1 // pred_check_branch
      %31 = sbr.rel (0) target = $region21
    $region20: #{tpu_custom_call.1} parent=1 // pred_region
      _
    $region21: #{tpu_custom_call.1} parent=1 // pred_fallthru
      _
    // Predicated region
    $region22: #{tpu_custom_call.1} parent=1 // pred_check
      _
    $region23: #{tpu_custom_call.1} parent=1 // pred_check_branch
      %33 = sbr.rel (0) target = $region25
    $region24: #{tpu_custom_call.1} parent=1 // pred_region
      %34 = dma.done [#allocation3], 512
    $region25: #{tpu_custom_call.1} parent=1 // pred_fallthru
      _
    %v35 = vld [vmem:[%s0] sm:$0xff]
    %v36 = vld [vmem:[%s0 + $0x8] sm:$0xff]
    %v37 = vld [vmem:[%s2] sm:$0xff]
    %v38 = vld [vmem:[#allocation2] sm:$0xff]
    %v39 = vld [vmem:[#allocation2 + $0x8] sm:$0xff]
    %v40 = vld [vmem:[#allocation2 + $0x10] sm:$0x1]
    %v41 = vld [vmem:[#allocation2 + $0x18] sm:$0x1]
    %42 = vrot.lane.b32.xlu0 %v35, 17
    %v43 = vpop.permute.xlu0 %42
    %44 = vrot.lane.b32.xlu0 %v36, 17
    %v45 = vpop.permute.xlu0 %44
    %v46 = vlaneseq
    %v47 = vand.u32 %v46, 127
    %vm48 = vcmp.lt.s32.totalorder %v47, 17
    %v49 = vsel %vm48, %v43, %v45
    %v50 = vsel %vm48, %v45, %v43
    %52 = vset.pattern.permute.xlu0 0
    %53 = vperm.xlu0 %52, %v37
    %v54 = vpop.permute.xlu0 %53
    %v56 = vmul.f32 %v50, %v54
    %v57 = vmul.f32 %v49, %v54
    %v58 = vlaneseq
    %v59 = vshrl.u32 %v58, 7
    %v60 = vsub.s32 0, %v59
    %v61 = vrot.slane %v38, %v60
    %v62 = vlaneseq
    %v63 = vshrl.u32 %v62, 7
    %v64 = vsub.s32 0, %v63
    %v65 = vrot.slane %v39, %v64
    %v66 = vmul.f32 %v56, %v61
    %v67 = vmul.f32 %v57, %v65
    %v68 = vadd.f32 %v66, 0.0
    %v69 = vadd.f32 %v67, 0.0
    %70 = vrot.lane.b32.xlu0 %v35, 16
    %v71 = vpop.permute.xlu0 %70
    %72 = vrot.lane.b32.xlu0 %v36, 16
    %v73 = vpop.permute.xlu0 %72
    %vm74 = vcmp.lt.s32.totalorder %v47, 16
    %v75 = vsel %vm74, %v71, %v73
    %v76 = vsel %vm74, %v73, %v71
    %77 = vset.pattern.permute.xlu0 1
    %78 = vperm.xlu0 %77, %v37
    %v79 = vpop.permute.xlu0 %78
    %v81 = vmul.f32 %v76, %v79
    %v82 = vmul.f32 %v75, %v79
    %v83 = vlaneseq
    %v84 = vshrl.u32 %v83, 7
    %v85 = vsub.s32 1, %v84
    %v86 = vrot.slane %v38, %v85
    %v87 = vlaneseq
    %v88 = vshrl.u32 %v87, 7
    %v89 = vsub.s32 1, %v88
    %v90 = vrot.slane %v39, %v89
    %v91 = vmul.f32 %v81, %v86
    %v92 = vmul.f32 %v82, %v90
    %v93 = vadd.f32 %v68, %v91
    %v94 = vadd.f32 %v69, %v92
    %95 = vrot.lane.b32.xlu0 %v35, 15
    %v96 = vpop.permute.xlu0 %95
    %97 = vrot.lane.b32.xlu0 %v36, 15
    %v98 = vpop.permute.xlu0 %97
    %vm99 = vcmp.lt.s32.totalorder %v47, 15
    %v100 = vsel %vm99, %v96, %v98
    %v101 = vsel %vm99, %v98, %v96
    %102 = vset.pattern.permute.xlu0 2
    %103 = vperm.xlu0 %102, %v37
    %v104 = vpop.permute.xlu0 %103
    %v106 = vmul.f32 %v101, %v104
    %v107 = vmul.f32 %v100, %v104
    %v108 = vlaneseq
    %v109 = vshrl.u32 %v108, 7
    %v110 = vsub.s32 2, %v109
    %v111 = vrot.slane %v38, %v110
    %v112 = vlaneseq
    %v113 = vshrl.u32 %v112, 7
    %v114 = vsub.s32 2, %v113
    %v115 = vrot.slane %v39, %v114
    %v116 = vmul.f32 %v106, %v111
    %v117 = vmul.f32 %v107, %v115
    %v118 = vadd.f32 %v93, %v116
    %v119 = vadd.f32 %v94, %v117
    %120 = vrot.lane.b32.xlu0 %v35, 1
    %v121 = vpop.permute.xlu0 %120
    %122 = vrot.lane.b32.xlu0 %v36, 1
    %v123 = vpop.permute.xlu0 %122
    %vm124 = vcmp.lt.s32.totalorder %v47, 1
    %v125 = vsel %vm124, %v121, %v123
    %v126 = vsel %vm124, %v123, %v121
    %127 = vset.pattern.permute.xlu0 3
    %128 = vperm.xlu0 %127, %v37
    %v129 = vpop.permute.xlu0 %128
    %v131 = vmul.f32 %v126, %v129
    %v132 = vmul.f32 %v125, %v129
    %v133 = vlaneseq
    %v134 = vshrl.u32 %v133, 7
    %v135 = vsub.s32 3, %v134
    %v136 = vrot.slane %v38, %v135
    %v137 = vlaneseq
    %v138 = vshrl.u32 %v137, 7
    %v139 = vsub.s32 3, %v138
    %v140 = vrot.slane %v39, %v139
    %v141 = vmul.f32 %v131, %v136
    %v142 = vmul.f32 %v132, %v140
    %v143 = vadd.f32 %v118, %v141
    %v144 = vadd.f32 %v119, %v142
    %145 = vset.pattern.permute.xlu0 4
    %146 = vperm.xlu0 %145, %v37
    %v147 = vpop.permute.xlu0 %146
    %v149 = vmul.f32 %v35, %v147
    %v150 = vmul.f32 %v36, %v147
    %v151 = vadd.f32 %v143, %v149
    %v152 = vadd.f32 %v144, %v150
    %153 = vrot.lane.b32.xlu0 %v35, 127
    %v154 = vpop.permute.xlu0 %153
    %155 = vrot.lane.b32.xlu0 %v36, 127
    %v156 = vpop.permute.xlu0 %155
    %vm157 = vcmp.lt.s32.totalorder %v47, 127
    %v158 = vsel %vm157, %v154, %v156
    %v159 = vsel %vm157, %v156, %v154
    %160 = vset.pattern.permute.xlu0 5
    %161 = vperm.xlu0 %160, %v37
    %v162 = vpop.permute.xlu0 %161
    %v164 = vmul.f32 %v158, %v162
    %v165 = vmul.f32 %v159, %v162
    %v166 = vlaneseq
    %v167 = vshrl.u32 %v166, 7
    %v168 = vsub.s32 5, %v167
    %v169 = vrot.slane %v38, %v168
    %v170 = vlaneseq
    %v171 = vshrl.u32 %v170, 7
    %v172 = vsub.s32 5, %v171
    %v173 = vrot.slane %v39, %v172
    %v174 = vmul.f32 %v164, %v169
    %v175 = vmul.f32 %v165, %v173
    %v176 = vadd.f32 %v151, %v174
    %v177 = vadd.f32 %v152, %v175
    %178 = vrot.lane.b32.xlu0 %v35, 113
    %v179 = vpop.permute.xlu0 %178
    %180 = vrot.lane.b32.xlu0 %v36, 113
    %v181 = vpop.permute.xlu0 %180
    %vm182 = vcmp.lt.s32.totalorder %v47, 113
    %v183 = vsel %vm182, %v179, %v181
    %v184 = vsel %vm182, %v181, %v179
    %185 = vset.pattern.permute.xlu0 6
    %186 = vperm.xlu0 %185, %v37
    %v187 = vpop.permute.xlu0 %186
    %v189 = vmul.f32 %v183, %v187
    %v190 = vmul.f32 %v184, %v187
    %v191 = vlaneseq
    %v192 = vshrl.u32 %v191, 7
    %v193 = vsub.s32 6, %v192
    %v194 = vrot.slane %v38, %v193
    %v195 = vlaneseq
    %v196 = vshrl.u32 %v195, 7
    %v197 = vsub.s32 6, %v196
    %v198 = vrot.slane %v39, %v197
    %v199 = vmul.f32 %v189, %v194
    %v200 = vmul.f32 %v190, %v198
    %v201 = vadd.f32 %v176, %v199
    %v202 = vadd.f32 %v177, %v200
    %203 = vrot.lane.b32.xlu0 %v35, 112
    %v204 = vpop.permute.xlu0 %203
    %205 = vrot.lane.b32.xlu0 %v36, 112
    %v206 = vpop.permute.xlu0 %205
    %vm207 = vcmp.lt.s32.totalorder %v47, 112
    %v208 = vsel %vm207, %v204, %v206
    %v209 = vsel %vm207, %v206, %v204
    %210 = vset.pattern.permute.xlu0 7
    %211 = vperm.xlu0 %210, %v37
    %v212 = vpop.permute.xlu0 %211
    %v214 = vmul.f32 %v208, %v212
    %v215 = vmul.f32 %v209, %v212
    %v216 = vlaneseq
    %v217 = vshrl.u32 %v216, 7
    %v218 = vsub.s32 7, %v217
    %v219 = vrot.slane %v38, %v218
    %v220 = vlaneseq
    %v221 = vshrl.u32 %v220, 7
    %v222 = vsub.s32 7, %v221
    %v223 = vrot.slane %v39, %v222
    %v224 = vmul.f32 %v214, %v219
    %v225 = vmul.f32 %v215, %v223
    %v226 = vadd.f32 %v201, %v224
    %v227 = vadd.f32 %v202, %v225
    %228 = vrot.lane.b32.xlu0 %v35, 111
    %v229 = vpop.permute.xlu0 %228
    %230 = vrot.lane.b32.xlu0 %v36, 111
    %v231 = vpop.permute.xlu0 %230
    %vm232 = vcmp.lt.s32.totalorder %v47, 111
    %v233 = vsel %vm232, %v229, %v231
    %v234 = vsel %vm232, %v231, %v229
    %235 = vset.pattern.permute.xlu0 8
    %236 = vperm.xlu0 %235, %v37
    %v237 = vpop.permute.xlu0 %236
    %v239 = vmul.f32 %v233, %v237
    %v240 = vmul.f32 %v234, %v237
    %v241 = vlaneseq
    %v242 = vshrl.u32 %v241, 7
    %v243 = vsub.s32 0, %v242
    %v244 = vrot.slane %v40, %v243
    %v245 = vlaneseq
    %v246 = vshrl.u32 %v245, 7
    %v247 = vsub.s32 0, %v246
    %v248 = vrot.slane %v41, %v247
    %v249 = vmul.f32 %v239, %v244
    %v250 = vmul.f32 %v240, %v248
    %v251 = vadd.f32 %v226, %v249
    %v252 = vadd.f32 %v227, %v250
    %v253 = vld [vmem:[%s3] sm:$0xff]
    %v254 = vld [vmem:[%s4] sm:$0xff]
    %256 = vset.pattern.permute.xlu0 0
    %257 = vperm.xlu0 %256, %v253
    %v258 = vpop.permute.xlu0 %257
    %v260 = vlaneseq
    %v261 = vshrl.u32 %v260, 7
    %v262 = vsub.s32 0, %v261
    %v263 = vrot.slane %v251, %v262
    %v264 = vlaneseq
    %v265 = vshrl.u32 %v264, 7
    %v266 = vsub.s32 0, %v265
    %v267 = vrot.slane %v252, %v266
    %v268 = vmul.f32 %v258, %v263
    %v269 = vmul.f32 %v258, %v267
    %270 = vset.pattern.permute.xlu0 1
    %271 = vperm.xlu0 %270, %v253
    %v272 = vpop.permute.xlu0 %271
    %v274 = vlaneseq
    %v275 = vshrl.u32 %v274, 7
    %v276 = vsub.s32 1, %v275
    %v277 = vrot.slane %v251, %v276
    %v278 = vlaneseq
    %v279 = vshrl.u32 %v278, 7
    %v280 = vsub.s32 1, %v279
    %v281 = vrot.slane %v252, %v280
    %v282 = vmul.f32 %v272, %v277
    %v283 = vmul.f32 %v272, %v281
    %v284 = vadd.f32 %v268, %v282
    %v285 = vadd.f32 %v269, %v283
    %286 = vset.pattern.permute.xlu0 2
    %287 = vperm.xlu0 %286, %v253
    %v288 = vpop.permute.xlu0 %287
    %v290 = vlaneseq
    %v291 = vshrl.u32 %v290, 7
    %v292 = vsub.s32 2, %v291
    %v293 = vrot.slane %v251, %v292
    %v294 = vlaneseq
    %v295 = vshrl.u32 %v294, 7
    %v296 = vsub.s32 2, %v295
    %v297 = vrot.slane %v252, %v296
    %v298 = vmul.f32 %v288, %v293
    %v299 = vmul.f32 %v288, %v297
    %v300 = vadd.f32 %v284, %v298
    %v301 = vadd.f32 %v285, %v299
    %302 = vset.pattern.permute.xlu0 3
    %303 = vperm.xlu0 %302, %v253
    %v304 = vpop.permute.xlu0 %303
    %v306 = vlaneseq
    %v307 = vshrl.u32 %v306, 7
    %v308 = vsub.s32 3, %v307
    %v309 = vrot.slane %v251, %v308
    %v310 = vlaneseq
    %v311 = vshrl.u32 %v310, 7
    %v312 = vsub.s32 3, %v311
    %v313 = vrot.slane %v252, %v312
    %v314 = vmul.f32 %v304, %v309
    %v315 = vmul.f32 %v304, %v313
    %v316 = vadd.f32 %v300, %v314
    %v317 = vadd.f32 %v301, %v315
    %319 = vset.pattern.permute.xlu0 0
    %320 = vperm.xlu0 %319, %v254
    %v321 = vpop.permute.xlu0 %320
    %v323 = vadd.f32 %v316, %v321
    %v324 = vadd.f32 %v317, %v321
    %325 = vst [vmem:[#allocation5] sm:$0xff] %v323
    %326 = vst [vmem:[#allocation5 + $0x8] sm:$0xff] %v324
    %v327 = vlaneseq
    %v328 = vshrl.u32 %v327, 7
    %v329 = vsub.s32 4, %v328
    %v330 = vrot.slane %v251, %v329
    %v331 = vlaneseq
    %v332 = vshrl.u32 %v331, 7
    %v333 = vsub.s32 4, %v332
    %v334 = vrot.slane %v252, %v333
    %v335 = vmul.f32 %v258, %v330
    %v336 = vmul.f32 %v258, %v334
    %v337 = vlaneseq
    %v338 = vshrl.u32 %v337, 7
    %v339 = vsub.s32 5, %v338
    %v340 = vrot.slane %v251, %v339
    %v341 = vlaneseq
    %v342 = vshrl.u32 %v341, 7
    %v343 = vsub.s32 5, %v342
    %v344 = vrot.slane %v252, %v343
    %v345 = vmul.f32 %v272, %v340
    %v346 = vmul.f32 %v272, %v344
    %v347 = vadd.f32 %v335, %v345
    %v348 = vadd.f32 %v336, %v346
    %v349 = vlaneseq
    %v350 = vshrl.u32 %v349, 7
    %v351 = vsub.s32 6, %v350
    %v352 = vrot.slane %v251, %v351
    %v353 = vlaneseq
    %v354 = vshrl.u32 %v353, 7
    %v355 = vsub.s32 6, %v354
    %v356 = vrot.slane %v252, %v355
    %v357 = vmul.f32 %v288, %v352
    %v358 = vmul.f32 %v288, %v356
    %v359 = vadd.f32 %v347, %v357
    %v360 = vadd.f32 %v348, %v358
    %v361 = vlaneseq
    %v362 = vshrl.u32 %v361, 7
    %v363 = vsub.s32 7, %v362
    %v364 = vrot.slane %v251, %v363
    %v365 = vlaneseq
    %v366 = vshrl.u32 %v365, 7
    %v367 = vsub.s32 7, %v366
    %v368 = vrot.slane %v252, %v367
    %v369 = vmul.f32 %v304, %v364
    %v370 = vmul.f32 %v304, %v368
    %v371 = vadd.f32 %v359, %v369
    %v372 = vadd.f32 %v360, %v370
    %v373 = vadd.f32 %v371, %v321
    %v374 = vadd.f32 %v372, %v321
    %375 = vst [vmem:[#allocation5 + $0x10] sm:$0xff] %v373
    %376 = vst [vmem:[#allocation5 + $0x18] sm:$0xff] %v374
    // Predicated region
    $region26: #{tpu_custom_call.1} parent=1 // pred_check
      _
    $region27: #{tpu_custom_call.1} parent=1 // pred_check_branch
      %378 = sbr.rel (0) target = $region29
    $region28: #{tpu_custom_call.1} parent=1 // pred_region
      %s380 = ssub.s32 512, 512
      %381 = vsyncadd [#allocation4], %s380
      %s382 = sshll.u32 [#allocation5], 4
      %s383 = int_to_ptr.vmem [resolvable:$true] %s382
      %388 = dma.vmem_to_hbm [thread:$0]  %s383, 512, %s5, [#allocation4], 256, 256, 16
    $region29: #{tpu_custom_call.1} parent=1 // pred_fallthru
      _
    // Predicated region
    $region30: #{tpu_custom_call.1} parent=1 // pred_check
      _
    $region31: #{tpu_custom_call.1} parent=1 // pred_check_branch
      %390 = sbr.rel (0) target = $region33
    $region32: #{tpu_custom_call.1} parent=1 // pred_region
      %391 = dma.done [#allocation4], 512
    $region33: #{tpu_custom_call.1} parent=1 // pred_fallthru
      _
    %392 = vsyncpa [#allocation3], 1
    %393 = vsyncpa [#allocation4], 1

</llo_original>
